<compile_context>
chip_gen: v7x
topology: tpu7x:2x2x1
jax: 0.10.0
libtpu: 0.0.40
codegen_flags: <defaults>
</compile_context>

<pallas_src>
import jax
import jax.numpy as jnp
from jax.experimental import pallas as pl
from jax.experimental.pallas import tpu as pltpu

_LANE = 128          # vreg lane width
_DEF_TILE_CAP = 512  # batch rows per grid step (512+ ~85% of HBM roofline)


def _round_up(x, m):
    return (x + m - 1) // m * m


def _sublane_rows(*dtypes):
    """Rows per sublane-aligned tile for the narrowest I/O dtype."""
    itemsize = min(jnp.dtype(d).itemsize for d in dtypes)
    return max(8, 32 // max(itemsize, 1))


def _num_tensorcores():
    """TensorCores that share this kernel's grid (v7x: 2, v5e/v6e: 1)."""
    try:
        info = pltpu.get_tpu_info()
        for attr in ("num_cores", "core_count", "num_tensorcores",
                     "tensorcore_count", "cores_per_chip", "num_cores_per_chip"):
            v = getattr(info, attr, None)
            if isinstance(v, int) and 1 <= v <= 8:
                return v
    except Exception:
        pass
    try:
        kind = jax.devices()[0].device_kind.lower()
        if "v7" in kind or "7x" in kind:
            return 2
    except Exception:
        pass
    return 1


def _mlp_kernel(x_ref, w1_ref, w2_ref, o_ref):
    # Cast activations to the MXU dtype in-kernel (VPU op, overlaps with DMA).
    x = x_ref[...].astype(w1_ref.dtype)
    # First linear + ReLU (MXU matmul, f32 accumulation).
    h = jnp.dot(x, w1_ref[...], preferred_element_type=jnp.float32)
    h = jnp.maximum(h, 0.0)
    # Second linear + ReLU (h truncated to the MXU dtype; accumulation f32).
    y = jnp.dot(h.astype(w2_ref.dtype), w2_ref[...],
                preferred_element_type=jnp.float32)
    y = jnp.maximum(y, 0.0)
    o_ref[...] = y.astype(o_ref.dtype)


def prepare_params(w1, w2, *, compute_dtype=jnp.bfloat16):
    """One-time parameter preparation (do at load time, NOT per forward call).

    w1 : (hidden_features, in_features)   -- PyTorch nn.Linear weight, layer 1
    w2 : (out_features, hidden_features)  -- PyTorch nn.Linear weight, layer 2

    Weights are pre-transposed (y = x @ W.T), the hidden / out feature dims
    are zero-padded to 128-lane multiples (exact: ReLU(0)=0 and zero rows of
    w2 contribute nothing), and cast to the MXU compute dtype.  The input
    feature dim is left at its logical size so x needs no per-call padding.
    Use compute_dtype=jnp.float32 for exact PyTorch parity; bf16 is the fast
    path (int8 is a further option on v5e/v6e only -- v7x's MXU has no int8).
    """
    hid_f, in_f = w1.shape
    out_f, hid_f2 = w2.shape
    assert hid_f == hid_f2, "weight shapes do not compose"

    hid_pad = _round_up(hid_f, _LANE)
    out_pad = _round_up(out_f, _LANE)

    w1_p = jnp.pad(w1.T, ((0, 0), (0, hid_pad - hid_f)))
    w2_p = jnp.pad(w2.T, ((0, hid_pad - hid_f), (0, out_pad - out_f)))
    return (w1_p.astype(compute_dtype),
            w2_p.astype(compute_dtype),
            (in_f, hid_f, out_f))


def neural_network_forward(x, w1_p, w2_p, logical_dims, *, tile_b=None,
                           out_dtype=None, single_buffer_weights=False):
    """Fused forward pass of the 2-layer bias-free MLP with ReLUs.

    x            : (B, in_features), any float dtype
    w1_p, w2_p   : outputs of prepare_params (padded / transposed / cast)
    logical_dims : (in_features, hidden_features, out_features)
    out_dtype    : output dtype (default: x.dtype); bf16 halves output HBM bytes
    """
    B, in_f_x = x.shape
    in_f, hid_f, out_f = logical_dims
    assert in_f_x == in_f, "input feature dim mismatch"
    in_w, hid_pad = w1_p.shape
    hid_pad2, out_pad = w2_p.shape
    assert in_w == in_f and hid_pad == hid_pad2, "prepared weights inconsistent"
    out_dtype = x.dtype if out_dtype is None else jnp.dtype(out_dtype)

    sublane = _sublane_rows(x.dtype, out_dtype)

    # ---- batch-tile policy: balanced tiles, generation-aware TC split ------
    if tile_b is None:
        n_steps = pl.cdiv(B, _DEF_TILE_CAP)
        ncores = _num_tensorcores()
        if ncores > 1 and B >= ncores * sublane:
            # v7x: give every TensorCore equal work (even step count).
            n_steps = _round_up(n_steps, ncores)
        tile_b = _round_up(pl.cdiv(B, n_steps), sublane)
    else:
        tile_b = max(sublane, _round_up(tile_b, sublane))
    n_steps = pl.cdiv(B, tile_b)          # last block edge-masked if partial
    grid = (n_steps,)

    # ---- VMEM budget (double-buffered activations + resident weights) ------
    x_bytes = x.dtype.itemsize
    o_bytes = jnp.dtype(out_dtype).itemsize
    w_total = (w1_p.size * w1_p.dtype.itemsize
               + w2_p.size * w2_p.dtype.itemsize)
    w_bufs = 1 if single_buffer_weights else 2
    vmem_est = (2 * tile_b * in_f * x_bytes           # x blocks (double-buffered)
                + 2 * tile_b * out_pad * o_bytes      # out blocks (double-buffered)
                + w_bufs * w_total                    # resident weights
                + tile_b * in_f * w1_p.dtype.itemsize # in-kernel x cast
                + tile_b * hid_pad * 4                # f32 h temp
                + tile_b * out_pad * 4)               # f32 y temp
    vmem_limit = min(64 << 20, max(32 << 20, int(1.5 * vmem_est)))

    # ---- cost hint: actual DMA bytes (no padded copies anymore) -------------
    cost = pl.CostEstimate(
        flops=2 * B * (in_f * hid_pad + hid_pad * out_pad),
        transcendentals=0,
        bytes_accessed=int(B * in_f * x_bytes
                           + w_total
                           + B * out_pad * o_bytes),
    )

    # Grid-invariant weight specs; optionally single-buffered (VMEM headroom).
    w_kwargs = {"pipeline_mode": pl.Buffered(1)} if single_buffer_weights else {}
    in_specs = [
        pl.BlockSpec((tile_b, in_f), lambda i: (i, 0)),
        pl.BlockSpec((in_f, hid_pad), lambda i: (0, 0), **w_kwargs),
        pl.BlockSpec((hid_pad, out_pad), lambda i: (0, 0), **w_kwargs),
    ]
    out_spec = pl.BlockSpec((tile_b, out_pad), lambda i: (i, 0))

    out_padded = pl.pallas_call(
        _mlp_kernel,
        out_shape=jax.ShapeDtypeStruct((B, out_pad), out_dtype),
        grid_spec=pltpu.PrefetchScalarGridSpec(
            num_scalar_prefetch=0,
            grid=grid,
            in_specs=in_specs,
            out_specs=out_spec,
        ),
        compiler_params=pltpu.CompilerParams(
            dimension_semantics=("parallel",),
            vmem_limit_bytes=vmem_limit),
        cost_estimate=cost,
    )(x, w1_p, w2_p)

    # Only the lane padding of the out-feature dim (if any) needs slicing.
    if out_pad == out_f:
        return out_padded
    return out_padded[:, :out_f]


if __name__ == "__main__":
    # Small shapes consistent with the module: batch=8, in=32, hidden=64, out=16
    B, IN_F, HID_F, OUT_F = 8, 32, 64, 16

    key = jax.random.PRNGKey(0)
    kx, k1, k2 = jax.random.split(key, 3)

    x = jax.random.normal(kx, (B, IN_F), dtype=jnp.float32)
    # PyTorch nn.Linear weight shapes: W1 (hidden, in), W2 (out, hidden).
    w1 = jax.random.normal(k1, (HID_F, IN_F), dtype=jnp.float32) * 0.1
    w2 = jax.random.normal(k2, (OUT_F, HID_F), dtype=jnp.float32) * 0.1

    # Pure-JAX reference (same math as the PyTorch forward, f32).
    ref = jnp.maximum(jnp.maximum(x @ w1.T, 0.0) @ w2.T, 0.0)

    # 1) f32 compute path: parity with the PyTorch forward.
    w1_f32, w2_f32, dims = prepare_params(w1, w2, compute_dtype=jnp.float32)
    out_f32 = jax.block_until_ready(
        neural_network_forward(x, w1_f32, w2_f32, dims))
    assert out_f32.shape == (B, OUT_F)
    assert jnp.allclose(out_f32, ref, atol=1e-5, rtol=1e-5)

    # 2) Default fast path: bf16 MXU inputs, f32 accumulation.
    w1_bf, w2_bf, dims = prepare_params(w1, w2)  # compute_dtype=bf16
    out_bf = jax.block_until_ready(
        neural_network_forward(x, w1_bf, w2_bf, dims))
    assert out_bf.shape == (B, OUT_F)
    assert jnp.allclose(out_bf, ref, atol=2e-2, rtol=2e-2)

    print("KERNEL_OK")
</pallas_src>

<mosaic_0001>
module attributes {stable_mosaic.version = 11 : i64} {
  func.func @_mlp_kernel(%arg0: i32, %arg1: memref<8x32xf32, #tpu.memory_space<vmem>>, %arg2: memref<32x128xf32, #tpu.memory_space<vmem>>, %arg3: memref<128x128xf32, #tpu.memory_space<vmem>>, %arg4: memref<8x128xf32, #tpu.memory_space<vmem>>) attributes {dimension_semantics = [#tpu.dimension_semantics<parallel>], iteration_bounds = array<i64: 1>, scalar_prefetch = 0 : i64, scratch_operands = 0 : i64, tpu.core_type = #tpu.core_type<tc>, window_params = [{transform_indices = @transform_0, window_bounds = array<i64: 8, 32>}, {pipeline_mode = #tpu.pipeline_mode<synchronous>, transform_indices = @transform_1, window_bounds = array<i64: 32, 128>}, {pipeline_mode = #tpu.pipeline_mode<synchronous>, transform_indices = @transform_2, window_bounds = array<i64: 128, 128>}, {transform_indices = @transform_3, window_bounds = array<i64: 8, 128>}]} {
    %c0 = arith.constant 0 : index
    %c0_0 = arith.constant 0 : index
    %0 = vector.load %arg1[%c0, %c0_0] : memref<8x32xf32, #tpu.memory_space<vmem>>, vector<8x32xf32>
    %c0_1 = arith.constant 0 : index
    %c0_2 = arith.constant 0 : index
    %1 = vector.load %arg2[%c0_1, %c0_2] : memref<32x128xf32, #tpu.memory_space<vmem>>, vector<32x128xf32>
    %cst = arith.constant dense<0.000000e+00> : vector<8x128xf32>
    %2 = tpu.matmul %0, %1, %cst {dimension_numbers = #tpu.dot_dimension_numbers<[1], [0], [0], [1], [0, 0, 1, 1], [], []>} : vector<8x32xf32>, vector<32x128xf32>, vector<8x128xf32> -> vector<8x128xf32>
    %cst_3 = arith.constant 0.000000e+00 : f32
    %3 = vector.broadcast %cst_3 : f32 to vector<8x128xf32>
    %4 = arith.maximumf %2, %3 : vector<8x128xf32>
    %c0_4 = arith.constant 0 : index
    %c0_5 = arith.constant 0 : index
    %5 = vector.load %arg3[%c0_4, %c0_5] : memref<128x128xf32, #tpu.memory_space<vmem>>, vector<128x128xf32>
    %cst_6 = arith.constant dense<0.000000e+00> : vector<8x128xf32>
    %6 = tpu.matmul %4, %5, %cst_6 {dimension_numbers = #tpu.dot_dimension_numbers<[1], [0], [0], [1], [0, 0, 1, 1], [], []>} : vector<8x128xf32>, vector<128x128xf32>, vector<8x128xf32> -> vector<8x128xf32>
    %cst_7 = arith.constant 0.000000e+00 : f32
    %7 = vector.broadcast %cst_7 : f32 to vector<8x128xf32>
    %8 = arith.maximumf %6, %7 : vector<8x128xf32>
    %c0_8 = arith.constant 0 : index
    %c0_9 = arith.constant 0 : index
    %9 = vector.load %arg4[%c0_8, %c0_9] : memref<8x128xf32, #tpu.memory_space<vmem>>, vector<8x128xf32>
    tpu.vector_store %arg4[%c0_8, %c0_9], %8 {strides = array<i32>} : memref<8x128xf32, #tpu.memory_space<vmem>>, vector<8x128xf32>,
    return
  }
  func.func @transform_0(%arg0: i32) -> (i32, i32) {
    %c0_i32 = arith.constant 0 : i32
    %c0_i32_0 = arith.constant 0 : i32
    return %arg0, %c0_i32 : i32, i32
  }
  func.func @transform_1(%arg0: i32) -> (i32, i32) {
    %c0_i32 = arith.constant 0 : i32
    %c0_i32_0 = arith.constant 0 : i32
    %c0_i32_1 = arith.constant 0 : i32
    return %c0_i32, %c0_i32_0 : i32, i32
  }
  func.func @transform_2(%arg0: i32) -> (i32, i32) {
    %c0_i32 = arith.constant 0 : i32
    %c0_i32_0 = arith.constant 0 : i32
    %c0_i32_1 = arith.constant 0 : i32
    return %c0_i32, %c0_i32_0 : i32, i32
  }
  func.func @transform_3(%arg0: i32) -> (i32, i32) {
    %c0_i32 = arith.constant 0 : i32
    %c0_i32_0 = arith.constant 0 : i32
    return %arg0, %c0_i32 : i32, i32
  }
}

</mosaic_0001>

<llo_original>
// kernel: tpu_custom_call.1
$region0: #{tpu_custom_call.1}
  #allocation0 [shape = 'u32[]', space=smem, size = 0x4, offset = 0x4, fixed_abs, tag = 'smem constant byte address 0x4 - core index']
  #allocation1 [shape = 'u32[144,128]{1,0:T(1,128)}', space=vmem, size = 0x12000, scoped, tag = 'internal scratch']
  %s0 = inlined_call_operand.hbm [shape: f32[8,32], index: 0, kind: input, shape index: {}]
  %s1 = inlined_call_operand.hbm [shape: f32[32,128], index: 1, kind: input, shape index: {}]
  %s2 = inlined_call_operand.hbm [shape: f32[128,128], index: 2, kind: input, shape index: {}]
  %s3 = inlined_call_operand.hbm [shape: f32[8,128], index: 3, kind: output, shape index: {}]
  %s4 = sld [smem:[#allocation0]]
  $region34: #{tpu_custom_call.1} parent=0
    _
  %s6 = ssub.s32 1, %s4
  %s7 = scalar_select 0, %s6, %s4
  $region1: #{tpu_custom_call.1} parent=0
    #allocation2 [shape = 'u8[4096]{0}', space=vmem, size = 0x1000, scoped, tag = 'input window, operand 0, single buffered']
    #allocation3 [shape = 's32[1]{0}', space=sflag, size = 0x4, scoped, tag = 'scoped memory for tpu_custom_call.1']
    #allocation4 [shape = 's32[1]{0}', space=sflag, size = 0x4, scoped, tag = 'scoped memory for tpu_custom_call.1']
    #allocation5 [shape = 'u8[16384]{0}', space=vmem, size = 0x4000, scoped, tag = 'input window, operand 1, single buffered']
    #allocation6 [shape = 's32[1]{0}', space=sflag, size = 0x4, scoped, tag = 'scoped memory for tpu_custom_call.1']
    #allocation7 [shape = 'u8[65536]{0}', space=vmem, size = 0x10000, scoped, tag = 'input window, operand 2, single buffered']
    #allocation8 [shape = 'u8[4096]{0}', space=vmem, size = 0x1000, scoped, tag = 'output window, operand 0, single buffered']
    %8 = vsyncpa [#allocation3], 0
    %9 = vsyncpa [#allocation6], 0
    %10 = vsyncpa [#allocation4], 0
    // Predicated region
    $region2: #{tpu_custom_call.1} parent=1 // pred_check
      _
    $region3: #{tpu_custom_call.1} parent=1 // pred_check_branch
      %12 = sbr.rel (0) target = $region5
    $region4: #{tpu_custom_call.1} parent=1 // pred_region
      %s14 = ssub.s32 128, 128
      %15 = vsyncadd [#allocation3], %s14
      %s17 = sshll.u32 [#allocation2], 4
      %s18 = int_to_ptr.vmem [resolvable:$true] %s17
      %20 = dma.hbm_to_vmem [thread:$0]  %s0, 128, %s18, [#allocation3]
    $region5: #{tpu_custom_call.1} parent=1 // pred_fallthru
      _
    // Predicated region
    $region6: #{tpu_custom_call.1} parent=1 // pred_check
      _
    $region7: #{tpu_custom_call.1} parent=1 // pred_check_branch
      %22 = sbr.rel (0) target = $region9
    $region8: #{tpu_custom_call.1} parent=1 // pred_region
      %s24 = ssub.s32 512, 512
      %25 = vsyncadd [#allocation6], %s24
      %s26 = sshll.u32 [#allocation5], 4
      %s27 = int_to_ptr.vmem [resolvable:$true] %s26
      %32 = dma.hbm_to_vmem [thread:$0]  %s1, 512, %s27, [#allocation6], 128, 128, 8
    $region9: #{tpu_custom_call.1} parent=1 // pred_fallthru
      _
    // Predicated region
    $region10: #{tpu_custom_call.1} parent=1 // pred_check
      _
    $region11: #{tpu_custom_call.1} parent=1 // pred_check_branch
      %34 = sbr.rel (0) target = $region13
    $region12: #{tpu_custom_call.1} parent=1 // pred_region
      %s36 = ssub.s32 2048, 2048
      %37 = vsyncadd [#allocation6], %s36
      %s38 = sshll.u32 [#allocation7], 4
      %s39 = int_to_ptr.vmem [resolvable:$true] %s38
      %44 = dma.hbm_to_vmem [thread:$0]  %s2, 2048, %s39, [#allocation6], 128, 128, 8
    $region13: #{tpu_custom_call.1} parent=1 // pred_fallthru
      _
    // Predicated region
    $region14: #{tpu_custom_call.1} parent=1 // pred_check
      _
    $region15: #{tpu_custom_call.1} parent=1 // pred_check_branch
      %46 = sbr.rel (0) target = $region17
    $region16: #{tpu_custom_call.1} parent=1 // pred_region
      %47 = dma.done [#allocation3], 128
    $region17: #{tpu_custom_call.1} parent=1 // pred_fallthru
      _
    // Predicated region
    $region18: #{tpu_custom_call.1} parent=1 // pred_check
      _
    $region19: #{tpu_custom_call.1} parent=1 // pred_check_branch
      %49 = sbr.rel (0) target = $region21
    $region20: #{tpu_custom_call.1} parent=1 // pred_region
      %50 = dma.done [#allocation6], 512
    $region21: #{tpu_custom_call.1} parent=1 // pred_fallthru
      _
    // Predicated region
    $region22: #{tpu_custom_call.1} parent=1 // pred_check
      _
    $region23: #{tpu_custom_call.1} parent=1 // pred_check_branch
      %52 = sbr.rel (0) target = $region25
    $region24: #{tpu_custom_call.1} parent=1 // pred_region
      %53 = dma.done [#allocation6], 2048
    $region25: #{tpu_custom_call.1} parent=1 // pred_fallthru
      _
    %v54 = vld [vmem:[#allocation2] sm:$0xff]
    %v55 = vld [vmem:[#allocation5] sm:$0xff]
    %v56 = vld [vmem:[#allocation5 + $0x8] sm:$0xff]
    %v57 = vld [vmem:[#allocation5 + $0x10] sm:$0xff]
    %v58 = vld [vmem:[#allocation5 + $0x18] sm:$0xff]
    %vm59 = vcmask 261120
    %v61 = vsel %vm59, %v54, 0
    %63 = vmatprep.subr.mxu0 0.0
    %64 = vmatpush1.msra.mxu0 %v55
    %65 = vmatprep.subr.mxu0 0.0
    %66 = vmatpush1.msra.mxu0 %v56
    %67 = vmatprep.subr.mxu0 0.0
    %68 = vmatpush1.msra.mxu0 %v57
    %69 = vmatprep.subr.mxu0 0.0
    %70 = vmatpush1.msra.mxu0 %v58
    %71 = vmatprep.subr.mxu0 0.0
    %72 = vmatpush1.msra.mxu0 0.0
    %73 = vmatprep.subr.mxu0 0.0
    %74 = vmatpush1.msra.mxu0 0.0
    %75 = vmatprep.subr.mxu0 0.0
    %76 = vmatpush1.msra.mxu0 0.0
    %77 = vmatprep.subr.mxu0 0.0
    %78 = vmatpush1.msra.mxu0 0.0
    %79 = vmatprep.subr.mxu0 0.0
    %80 = vmatpush1.msra.mxu0 0.0
    %81 = vmatprep.subr.mxu0 0.0
    %82 = vmatpush1.msra.mxu0 0.0
    %83 = vmatprep.subr.mxu0 0.0
    %84 = vmatpush1.msra.mxu0 0.0
    %85 = vmatprep.subr.mxu0 0.0
    %86 = vmatpush1.msra.mxu0 0.0
    %87 = vmatprep.subr.mxu0 0.0
    %88 = vmatpush1.msra.mxu0 0.0
    %89 = vmatprep.subr.mxu0 0.0
    %90 = vmatpush1.msra.mxu0 0.0
    %91 = vmatprep.subr.mxu0 0.0
    %92 = vmatpush1.msra.mxu0 0.0
    %93 = vmatprep.subr.mxu0 0.0
    %94 = vmatpush1.msra.mxu0 0.0
    %95 = vmatprep.subr.mxu0 0.0
    %96 = vmatpush1.msra.mxu0 0.0
    %97 = vmatprep.subr.mxu0 0.0
    %98 = vmatpush1.msra.mxu0 0.0
    %99 = vmatprep.subr.mxu0 0.0
    %100 = vmatpush1.msra.mxu0 0.0
    %101 = vmatprep.subr.mxu0 0.0
    %102 = vmatpush1.msra.mxu0 0.0
    %103 = vmatprep.subr.mxu0 0.0
    %104 = vmatpush1.msra.mxu0 0.0
    %105 = vmatprep.subr.mxu0 0.0
    %106 = vmatpush1.msra.mxu0 0.0
    %107 = vmatprep.subr.mxu0 0.0
    %108 = vmatpush1.msra.mxu0 0.0
    %109 = vmatprep.subr.mxu0 0.0
    %110 = vmatpush1.msra.mxu0 0.0
    %111 = vmatprep.subr.mxu0 0.0
    %112 = vmatpush1.msra.mxu0 0.0
    %113 = vmatprep.subr.mxu0 0.0
    %114 = vmatpush1.msra.mxu0 0.0
    %115 = vmatprep.subr.mxu0 0.0
    %116 = vmatpush1.msra.mxu0 0.0
    %117 = vmatprep.subr.mxu0 0.0
    %118 = vmatpush1.msra.mxu0 0.0
    %119 = vmatprep.subr.mxu0 0.0
    %120 = vmatpush1.msra.mxu0 0.0
    %121 = vmatprep.subr.mxu0 0.0
    %122 = vmatpush1.msra.mxu0 0.0
    %123 = vmatprep.subr.mxu0 0.0
    %124 = vmatpush1.msra.mxu0 0.0
    %125 = vmatprep.subr.mxu0 0.0
    %126 = vmatpush1.msra.mxu0 0.0
    %127 = vmatprep.mubr.f32.mxu0 0.0
    %128 = vmatmul.mubr.f32.gmra.mrb[0].mxu0 %v61
    %v129 = vpop.f32.mrb[0].mxu0
    %v130 = vadd.f32 0.0, %v129
    %v131 = vpop.f32.mrb[0].mxu0
    %132 = vdwg.mxu0
    %v133 = vmax.f32 %v130, 0.0
    %v134 = vld [vmem:[#allocation7] sm:$0xff]
    %v135 = vld [vmem:[#allocation7 + $0x8] sm:$0xff]
    %v136 = vld [vmem:[#allocation7 + $0x10] sm:$0xff]
    %v137 = vld [vmem:[#allocation7 + $0x18] sm:$0xff]
    %v138 = vld [vmem:[#allocation7 + $0x20] sm:$0xff]
    %v139 = vld [vmem:[#allocation7 + $0x28] sm:$0xff]
    %v140 = vld [vmem:[#allocation7 + $0x30] sm:$0xff]
    %v141 = vld [vmem:[#allocation7 + $0x38] sm:$0xff]
    %v142 = vld [vmem:[#allocation7 + $0x40] sm:$0xff]
    %v143 = vld [vmem:[#allocation7 + $0x48] sm:$0xff]
    %v144 = vld [vmem:[#allocation7 + $0x50] sm:$0xff]
    %v145 = vld [vmem:[#allocation7 + $0x58] sm:$0xff]
    %v146 = vld [vmem:[#allocation7 + $0x60] sm:$0xff]
    %v147 = vld [vmem:[#allocation7 + $0x68] sm:$0xff]
    %v148 = vld [vmem:[#allocation7 + $0x70] sm:$0xff]
    %v149 = vld [vmem:[#allocation7 + $0x78] sm:$0xff]
    %150 = vmatprep.subr.mxu0 0.0
    %151 = vmatpush1.msra.mxu0 %v134
    %152 = vmatprep.subr.mxu0 0.0
    %153 = vmatpush1.msra.mxu0 %v135
    %154 = vmatprep.subr.mxu0 0.0
    %155 = vmatpush1.msra.mxu0 %v136
    %156 = vmatprep.subr.mxu0 0.0
    %157 = vmatpush1.msra.mxu0 %v137
    %158 = vmatprep.subr.mxu0 0.0
    %159 = vmatpush1.msra.mxu0 %v138
    %160 = vmatprep.subr.mxu0 0.0
    %161 = vmatpush1.msra.mxu0 %v139
    %162 = vmatprep.subr.mxu0 0.0
    %163 = vmatpush1.msra.mxu0 %v140
    %164 = vmatprep.subr.mxu0 0.0
    %165 = vmatpush1.msra.mxu0 %v141
    %166 = vmatprep.subr.mxu0 0.0
    %167 = vmatpush1.msra.mxu0 %v142
    %168 = vmatprep.subr.mxu0 0.0
    %169 = vmatpush1.msra.mxu0 %v143
    %170 = vmatprep.subr.mxu0 0.0
    %171 = vmatpush1.msra.mxu0 %v144
    %172 = vmatprep.subr.mxu0 0.0
    %173 = vmatpush1.msra.mxu0 %v145
    %174 = vmatprep.subr.mxu0 0.0
    %175 = vmatpush1.msra.mxu0 %v146
    %176 = vmatprep.subr.mxu0 0.0
    %177 = vmatpush1.msra.mxu0 %v147
    %178 = vmatprep.subr.mxu0 0.0
    %179 = vmatpush1.msra.mxu0 %v148
    %180 = vmatprep.subr.mxu0 0.0
    %181 = vmatpush1.msra.mxu0 %v149
    %182 = vmatprep.subr.mxu0 0.0
    %183 = vmatpush1.msra.mxu0 0.0
    %184 = vmatprep.subr.mxu0 0.0
    %185 = vmatpush1.msra.mxu0 0.0
    %186 = vmatprep.subr.mxu0 0.0
    %187 = vmatpush1.msra.mxu0 0.0
    %188 = vmatprep.subr.mxu0 0.0
    %189 = vmatpush1.msra.mxu0 0.0
    %190 = vmatprep.subr.mxu0 0.0
    %191 = vmatpush1.msra.mxu0 0.0
    %192 = vmatprep.subr.mxu0 0.0
    %193 = vmatpush1.msra.mxu0 0.0
    %194 = vmatprep.subr.mxu0 0.0
    %195 = vmatpush1.msra.mxu0 0.0
    %196 = vmatprep.subr.mxu0 0.0
    %197 = vmatpush1.msra.mxu0 0.0
    %198 = vmatprep.subr.mxu0 0.0
    %199 = vmatpush1.msra.mxu0 0.0
    %200 = vmatprep.subr.mxu0 0.0
    %201 = vmatpush1.msra.mxu0 0.0
    %202 = vmatprep.subr.mxu0 0.0
    %203 = vmatpush1.msra.mxu0 0.0
    %204 = vmatprep.subr.mxu0 0.0
    %205 = vmatpush1.msra.mxu0 0.0
    %206 = vmatprep.subr.mxu0 0.0
    %207 = vmatpush1.msra.mxu0 0.0
    %208 = vmatprep.subr.mxu0 0.0
    %209 = vmatpush1.msra.mxu0 0.0
    %210 = vmatprep.subr.mxu0 0.0
    %211 = vmatpush1.msra.mxu0 0.0
    %212 = vmatprep.subr.mxu0 0.0
    %213 = vmatpush1.msra.mxu0 0.0
    %214 = vmatprep.mubr.f32.mxu0 0.0
    %215 = vmatmul.mubr.f32.gmra.mrb[0].mxu0 %v133
    %v216 = vpop.f32.mrb[0].mxu0
    %v217 = vadd.f32 0.0, %v216
    %v218 = vpop.f32.mrb[0].mxu0
    %219 = vdwg.mxu0
    %v220 = vmax.f32 %v217, 0.0
    %221 = vst [vmem:[#allocation8] sm:$0xff] %v220
    // Predicated region
    $region26: #{tpu_custom_call.1} parent=1 // pred_check
      _
    $region27: #{tpu_custom_call.1} parent=1 // pred_check_branch
      %223 = sbr.rel (0) target = $region29
    $region28: #{tpu_custom_call.1} parent=1 // pred_region
      %s225 = ssub.s32 128, 128
      %226 = vsyncadd [#allocation4], %s225
      %s228 = sshll.u32 [#allocation8], 4
      %s229 = int_to_ptr.vmem [resolvable:$true] %s228
      %231 = dma.vmem_to_hbm [thread:$0]  %s229, 128, %s3, [#allocation4]
    $region29: #{tpu_custom_call.1} parent=1 // pred_fallthru
      _
    // Predicated region
    $region30: #{tpu_custom_call.1} parent=1 // pred_check
      _
    $region31: #{tpu_custom_call.1} parent=1 // pred_check_branch
      %233 = sbr.rel (0) target = $region33
    $region32: #{tpu_custom_call.1} parent=1 // pred_region
      %234 = dma.done [#allocation4], 128
    $region33: #{tpu_custom_call.1} parent=1 // pred_fallthru
      _
    %235 = vsyncpa [#allocation3], 1
    %236 = vsyncpa [#allocation6], 1
    %237 = vsyncpa [#allocation4], 1

</llo_original>
